<compile_context>
chip_gen: v6e
topology: v6e:2x2x1
jax: 0.10.0
libtpu: 0.0.40
codegen_flags: <defaults>
</compile_context>

<pallas_src>
import functools

import jax
import jax.numpy as jnp
from jax.experimental import pallas as pl
from jax.experimental.pallas import tpu as pltpu

EPS = 1e-5
# Per-call VMEM budget used only for tile sizing (double-buffered streams).
_VMEM_BUDGET_BYTES = 32 * 1024 * 1024
_VMEM_LIMIT_BYTES = 48 << 20          # scoped limit: headroom on v7x (64 MiB phys)
_MAX_TILE_ROWS = 1024


def _sublayer_connection_kernel(x_ref, y_ref, gamma_ref, beta_ref, o_ref, *, hidden):
    # Residual add; upcast to f32 so bf16 I/O keeps full-precision statistics.
    z = x_ref[...].astype(jnp.float32) + y_ref[...].astype(jnp.float32)

    # Single-pass LayerNorm statistics: two independent reductions that can
    # pipeline on the XLU while the VPU produces z and z*z.
    inv_h = 1.0 / float(hidden)
    s1 = jnp.sum(z, axis=-1, keepdims=True)
    s2 = jnp.sum(z * z, axis=-1, keepdims=True)
    mean = s1 * inv_h
    var = jnp.maximum(s2 * inv_h - mean * mean, 0.0)  # clamp: cancellation guard
    inv = jax.lax.rsqrt(var + EPS)

    out = (z - mean) * inv * gamma_ref[...] + beta_ref[...]
    o_ref[...] = out.astype(o_ref.dtype)


def _pick_tile_rows(rows, hidden, itemsize):
    """Largest row tile that fits the VMEM budget (3 streams, double-buffered)."""
    pack = 16 if itemsize == 2 else 8           # min sublane tile (bf16 vs f32)
    per_row_bytes = 3 * 2 * hidden * itemsize   # x, y, out  x  2 pipeline buffers
    t = _VMEM_BUDGET_BYTES // max(per_row_bytes, 1)
    t = min(t, _MAX_TILE_ROWS)
    t = max(t, pack)
    t = (t // pack) * pack
    # No point making the tile larger than the (packed-up) row count.
    rows_up = ((rows + pack - 1) // pack) * pack
    return min(t, rows_up)


def sublayer_connection(x, y, gamma, beta, *, tile_rows=None):
    """out = LayerNorm(x + y) over the last dim.  x, y: (..., hidden)."""
    orig_shape = x.shape
    hidden = orig_shape[-1]
    dtype = x.dtype

    x2 = x.reshape(-1, hidden)
    y2 = y.reshape(-1, hidden).astype(dtype)
    rows = x2.shape[0]

    if tile_rows is None:
        tile_rows = _pick_tile_rows(rows, hidden, jnp.dtype(dtype).itemsize)

    # Ragged row counts: pad up to a tile multiple, slice the result back.
    padded_rows = pl.cdiv(rows, tile_rows) * tile_rows
    if padded_rows != rows:
        pad = padded_rows - rows
        x2 = jnp.pad(x2, ((0, pad), (0, 0)))
        y2 = jnp.pad(y2, ((0, pad), (0, 0)))

    # Keep LayerNorm params in f32 for the affine epilogue.
    gamma2 = gamma.reshape(1, hidden).astype(jnp.float32)
    beta2 = beta.reshape(1, hidden).astype(jnp.float32)

    grid = (padded_rows // tile_rows,)
    kernel = functools.partial(_sublayer_connection_kernel, hidden=hidden)

    out = pl.pallas_call(
        kernel,
        out_shape=jax.ShapeDtypeStruct((padded_rows, hidden), dtype),
        grid_spec=pltpu.PrefetchScalarGridSpec(
            num_scalar_prefetch=0,
            grid=grid,
            in_specs=[
                pl.BlockSpec((tile_rows, hidden), lambda i: (i, 0)),
                pl.BlockSpec((tile_rows, hidden), lambda i: (i, 0)),
                pl.BlockSpec((1, hidden), lambda i: (0, 0)),
                pl.BlockSpec((1, hidden), lambda i: (0, 0)),
            ],
            out_specs=pl.BlockSpec((tile_rows, hidden), lambda i: (i, 0)),
        ),
        compiler_params=pltpu.CompilerParams(
            dimension_semantics=("parallel",),   # lets v7x shard across 2 TCs
            vmem_limit_bytes=_VMEM_LIMIT_BYTES,  # raise v5e's 16 MiB default
        ),
    )(x2, y2, gamma2, beta2)

    if padded_rows != rows:
        out = out[:rows]
    return out.reshape(orig_shape)


def _reference(x, y, gamma, beta):
    z = (x + y).astype(jnp.float32)
    mean = jnp.mean(z, axis=-1, keepdims=True)
    var = jnp.mean((z - mean) ** 2, axis=-1, keepdims=True)
    return (z - mean) / jnp.sqrt(var + EPS) * gamma + beta


if __name__ == "__main__":
    batch, seq, hidden = 2, 8, 128   # hidden = 128: lane-dense last dim

    key = jax.random.PRNGKey(0)
    kx, kw = jax.random.split(key)

    x = jax.random.normal(kx, (batch, seq, hidden), dtype=jnp.float32)

    # Deterministic example "sublayer": a simple linear map (plain-JAX glue).
    w = jax.random.normal(kw, (hidden, hidden), dtype=jnp.float32) * 0.02
    sublayer = lambda t: jnp.einsum("bsh,hk->bsk", t, w)
    y = sublayer(x)  # dropout(eval) == identity

    # LayerNorm parameters, deterministic per nn.LayerNorm.__init__
    gamma = jnp.ones((hidden,), dtype=jnp.float32)
    beta = jnp.zeros((hidden,), dtype=jnp.float32)

    # --- f32 path ---
    out = sublayer_connection(x, y, gamma, beta)
    out = jax.block_until_ready(out)
    ref = _reference(x, y, gamma, beta)
    assert out.shape == x.shape
    assert jnp.max(jnp.abs(out - ref)) < 1e-4, "f32 mismatch vs reference"

    # --- bf16 I/O path (halves HBM traffic for real transformer activations) ---
    x_bf = x.astype(jnp.bfloat16)
    y_bf = y.astype(jnp.bfloat16)
    out_bf = sublayer_connection(x_bf, y_bf, gamma, beta)
    out_bf = jax.block_until_ready(out_bf)
    ref_bf = _reference(x_bf.astype(jnp.float32), y_bf.astype(jnp.float32), gamma, beta)
    assert out_bf.dtype == jnp.bfloat16
    assert jnp.max(jnp.abs(out_bf.astype(jnp.float32) - ref_bf)) < 3e-2, \
        "bf16 mismatch vs reference"

    print("KERNEL_OK")
</pallas_src>

<mosaic_0001>
module attributes {stable_mosaic.version = 11 : i64} {
  func.func @_sublayer_connection_kernel(%arg0: i32, %arg1: memref<16x128xf32, #tpu.memory_space<vmem>>, %arg2: memref<16x128xf32, #tpu.memory_space<vmem>>, %arg3: memref<1x128xf32, #tpu.memory_space<vmem>>, %arg4: memref<1x128xf32, #tpu.memory_space<vmem>>, %arg5: memref<16x128xf32, #tpu.memory_space<vmem>>) attributes {dimension_semantics = [#tpu.dimension_semantics<parallel>], iteration_bounds = array<i64: 1>, scalar_prefetch = 0 : i64, scratch_operands = 0 : i64, tpu.core_type = #tpu.core_type<tc>, window_params = [{transform_indices = @transform_0, window_bounds = array<i64: 16, 128>}, {transform_indices = @transform_1, window_bounds = array<i64: 16, 128>}, {pipeline_mode = #tpu.pipeline_mode<synchronous>, transform_indices = @transform_2, window_bounds = array<i64: 1, 128>}, {pipeline_mode = #tpu.pipeline_mode<synchronous>, transform_indices = @transform_3, window_bounds = array<i64: 1, 128>}, {transform_indices = @transform_4, window_bounds = array<i64: 16, 128>}]} {
    %c0 = arith.constant 0 : index
    %c0_0 = arith.constant 0 : index
    %0 = vector.load %arg1[%c0, %c0_0] : memref<16x128xf32, #tpu.memory_space<vmem>>, vector<16x128xf32>
    %c0_1 = arith.constant 0 : index
    %c0_2 = arith.constant 0 : index
    %1 = vector.load %arg2[%c0_1, %c0_2] : memref<16x128xf32, #tpu.memory_space<vmem>>, vector<16x128xf32>
    %2 = arith.addf %0, %1 : vector<16x128xf32>
    %cst = arith.constant dense<0.000000e+00> : vector<16xf32>
    %3 = vector.multi_reduction <add>, %2, %cst [1] : vector<16x128xf32> to vector<16xf32>
    %4 = vector.shape_cast %3 : vector<16xf32> to vector<16x1xf32>
    %5 = arith.mulf %2, %2 : vector<16x128xf32>
    %cst_3 = arith.constant dense<0.000000e+00> : vector<16xf32>
    %6 = vector.multi_reduction <add>, %5, %cst_3 [1] : vector<16x128xf32> to vector<16xf32>
    %7 = vector.shape_cast %6 : vector<16xf32> to vector<16x1xf32>
    %cst_4 = arith.constant 7.812500e-03 : f32
    %8 = vector.broadcast %cst_4 : f32 to vector<16x1xf32>
    %9 = arith.mulf %4, %8 : vector<16x1xf32>
    %cst_5 = arith.constant 7.812500e-03 : f32
    %10 = vector.broadcast %cst_5 : f32 to vector<16x1xf32>
    %11 = arith.mulf %7, %10 : vector<16x1xf32>
    %12 = arith.mulf %9, %9 : vector<16x1xf32>
    %13 = arith.subf %11, %12 : vector<16x1xf32>
    %cst_6 = arith.constant 0.000000e+00 : f32
    %14 = vector.broadcast %cst_6 : f32 to vector<16x1xf32>
    %15 = arith.maximumf %13, %14 : vector<16x1xf32>
    %cst_7 = arith.constant 9.99999974E-6 : f32
    %16 = vector.broadcast %cst_7 : f32 to vector<16x1xf32>
    %17 = arith.addf %15, %16 : vector<16x1xf32>
    %18 = math.rsqrt %17 : vector<16x1xf32>
    %19 = vector.broadcast %9 : vector<16x1xf32> to vector<16x128xf32>
    %20 = arith.subf %2, %19 : vector<16x128xf32>
    %21 = vector.broadcast %18 : vector<16x1xf32> to vector<16x128xf32>
    %22 = arith.mulf %20, %21 : vector<16x128xf32>
    %c0_8 = arith.constant 0 : index
    %c0_9 = arith.constant 0 : index
    %23 = vector.load %arg3[%c0_8, %c0_9] : memref<1x128xf32, #tpu.memory_space<vmem>>, vector<1x128xf32>
    %24 = vector.broadcast %23 : vector<1x128xf32> to vector<16x128xf32>
    %25 = arith.mulf %22, %24 : vector<16x128xf32>
    %c0_10 = arith.constant 0 : index
    %c0_11 = arith.constant 0 : index
    %26 = vector.load %arg4[%c0_10, %c0_11] : memref<1x128xf32, #tpu.memory_space<vmem>>, vector<1x128xf32>
    %27 = vector.broadcast %26 : vector<1x128xf32> to vector<16x128xf32>
    %28 = arith.addf %25, %27 : vector<16x128xf32>
    %c0_12 = arith.constant 0 : index
    %c0_13 = arith.constant 0 : index
    %29 = vector.load %arg5[%c0_12, %c0_13] : memref<16x128xf32, #tpu.memory_space<vmem>>, vector<16x128xf32>
    tpu.vector_store %arg5[%c0_12, %c0_13], %28 {strides = array<i32>} : memref<16x128xf32, #tpu.memory_space<vmem>>, vector<16x128xf32>,
    return
  }
  func.func @transform_0(%arg0: i32) -> (i32, i32) {
    %c0_i32 = arith.constant 0 : i32
    %c0_i32_0 = arith.constant 0 : i32
    return %arg0, %c0_i32 : i32, i32
  }
  func.func @transform_1(%arg0: i32) -> (i32, i32) {
    %c0_i32 = arith.constant 0 : i32
    %c0_i32_0 = arith.constant 0 : i32
    return %arg0, %c0_i32 : i32, i32
  }
  func.func @transform_2(%arg0: i32) -> (i32, i32) {
    %c0_i32 = arith.constant 0 : i32
    %c0_i32_0 = arith.constant 0 : i32
    %c0_i32_1 = arith.constant 0 : i32
    return %c0_i32, %c0_i32_0 : i32, i32
  }
  func.func @transform_3(%arg0: i32) -> (i32, i32) {
    %c0_i32 = arith.constant 0 : i32
    %c0_i32_0 = arith.constant 0 : i32
    %c0_i32_1 = arith.constant 0 : i32
    return %c0_i32, %c0_i32_0 : i32, i32
  }
  func.func @transform_4(%arg0: i32) -> (i32, i32) {
    %c0_i32 = arith.constant 0 : i32
    %c0_i32_0 = arith.constant 0 : i32
    return %arg0, %c0_i32 : i32, i32
  }
}

</mosaic_0001>

<llo_original>
// kernel: tpu_custom_call.1
$region0: #{tpu_custom_call.1}
  #allocation0 [shape = 'u32[]', space=smem, size = 0x4, offset = 0x4, fixed_abs, tag = 'smem constant byte address 0x4 - core index']
  #allocation1 [shape = 'u32[144,128]{1,0:T(1,128)}', space=vmem, size = 0x12000, scoped, tag = 'internal scratch']
  %s0 = inlined_call_operand.hbm [shape: f32[16,128], index: 0, kind: input, shape index: {}]
  %s1 = inlined_call_operand.hbm [shape: f32[16,128], index: 1, kind: input, shape index: {}]
  %s2 = inlined_call_operand.vmem [shape: f32[1,128], index: 2, kind: input, shape index: {}]
  %s3 = inlined_call_operand.vmem [shape: f32[1,128], index: 3, kind: input, shape index: {}]
  %s4 = inlined_call_operand.hbm [shape: f32[16,128], index: 4, kind: output, shape index: {}]
  %s5 = sld [smem:[#allocation0]]
  $region34: #{tpu_custom_call.1} parent=0
    _
  %s7 = ssub.s32 1, %s5
  %s8 = scalar_select 0, %s7, %s5
  $region1: #{tpu_custom_call.1} parent=0
    #allocation2 [shape = 'u8[8192]{0}', space=vmem, size = 0x2000, scoped, tag = 'input window, operand 0, single buffered']
    #allocation3 [shape = 's32[1]{0}', space=sflag, size = 0x4, scoped, tag = 'scoped memory for tpu_custom_call.1']
    #allocation4 [shape = 's32[1]{0}', space=sflag, size = 0x4, scoped, tag = 'scoped memory for tpu_custom_call.1']
    #allocation5 [shape = 'u8[8192]{0}', space=vmem, size = 0x2000, scoped, tag = 'input window, operand 1, single buffered']
    #allocation6 [shape = 's32[1]{0}', space=sflag, size = 0x4, scoped, tag = 'scoped memory for tpu_custom_call.1']
    #allocation7 [shape = 'u8[8192]{0}', space=vmem, size = 0x2000, scoped, tag = 'output window, operand 0, single buffered']
    %9 = vsyncpa [#allocation3], 0
    %10 = vsyncpa [#allocation6], 0
    %11 = vsyncpa [#allocation4], 0
    // Predicated region
    $region2: #{tpu_custom_call.1} parent=1 // pred_check
      _
    $region3: #{tpu_custom_call.1} parent=1 // pred_check_branch
      %13 = sbr.rel (0) target = $region5
    $region4: #{tpu_custom_call.1} parent=1 // pred_region
      %s15 = ssub.s32 256, 256
      %16 = vsyncadd [#allocation3], %s15
      %s17 = sshll.u32 [#allocation2], 4
      %s18 = int_to_ptr.vmem [resolvable:$true] %s17
      %23 = dma.hbm_to_vmem [thread:$0]  %s0, 256, %s18, [#allocation3], 128, 128, 8
    $region5: #{tpu_custom_call.1} parent=1 // pred_fallthru
      _
    // Predicated region
    $region6: #{tpu_custom_call.1} parent=1 // pred_check
      _
    $region7: #{tpu_custom_call.1} parent=1 // pred_check_branch
      %25 = sbr.rel (0) target = $region9
    $region8: #{tpu_custom_call.1} parent=1 // pred_region
      %s27 = ssub.s32 256, 256
      %28 = vsyncadd [#allocation6], %s27
      %s29 = sshll.u32 [#allocation5], 4
      %s30 = int_to_ptr.vmem [resolvable:$true] %s29
      %35 = dma.hbm_to_vmem [thread:$0]  %s1, 256, %s30, [#allocation6], 128, 128, 8
    $region9: #{tpu_custom_call.1} parent=1 // pred_fallthru
      _
    // Predicated region
    $region10: #{tpu_custom_call.1} parent=1 // pred_check
      _
    $region11: #{tpu_custom_call.1} parent=1 // pred_check_branch
      %37 = sbr.rel (0) target = $region13
    $region12: #{tpu_custom_call.1} parent=1 // pred_region
      _
    $region13: #{tpu_custom_call.1} parent=1 // pred_fallthru
      _
    // Predicated region
    $region14: #{tpu_custom_call.1} parent=1 // pred_check
      _
    $region15: #{tpu_custom_call.1} parent=1 // pred_check_branch
      %39 = sbr.rel (0) target = $region17
    $region16: #{tpu_custom_call.1} parent=1 // pred_region
      _
    $region17: #{tpu_custom_call.1} parent=1 // pred_fallthru
      _
    // Predicated region
    $region18: #{tpu_custom_call.1} parent=1 // pred_check
      _
    $region19: #{tpu_custom_call.1} parent=1 // pred_check_branch
      %41 = sbr.rel (0) target = $region21
    $region20: #{tpu_custom_call.1} parent=1 // pred_region
      %42 = dma.done [#allocation3], 256
    $region21: #{tpu_custom_call.1} parent=1 // pred_fallthru
      _
    // Predicated region
    $region22: #{tpu_custom_call.1} parent=1 // pred_check
      _
    $region23: #{tpu_custom_call.1} parent=1 // pred_check_branch
      %44 = sbr.rel (0) target = $region25
    $region24: #{tpu_custom_call.1} parent=1 // pred_region
      %45 = dma.done [#allocation6], 256
    $region25: #{tpu_custom_call.1} parent=1 // pred_fallthru
      _
    %v46 = vld [vmem:[#allocation2] sm:$0xff]
    %v47 = vld [vmem:[#allocation2 + $0x8] sm:$0xff]
    %v48 = vld [vmem:[#allocation5] sm:$0xff]
    %v49 = vld [vmem:[#allocation5 + $0x8] sm:$0xff]
    %v50 = vadd.f32 %v46, %v48
    %v51 = vadd.f32 %v47, %v49
    %52 = vadd.xlane.f32.xlu0 %v50
    %v53 = vpop.xlane.xlu0 %52
    %54 = vadd.xlane.f32.xlu0 %v51
    %v55 = vpop.xlane.xlu0 %54
    %v56 = vmul.f32 %v50, %v50
    %v57 = vmul.f32 %v51, %v51
    %58 = vadd.xlane.f32.xlu0 %v56
    %v59 = vpop.xlane.xlu0 %58
    %60 = vadd.xlane.f32.xlu0 %v57
    %v61 = vpop.xlane.xlu0 %60
    %v62 = vmul.f32 %v53, 0.0078125
    %v63 = vmul.f32 %v55, 0.0078125
    %v64 = vmul.f32 %v59, 0.0078125
    %v65 = vmul.f32 %v61, 0.0078125
    %v66 = vmul.f32 %v62, %v62
    %v67 = vmul.f32 %v63, %v63
    %v68 = vsub.f32 %v64, %v66
    %v69 = vsub.f32 %v65, %v67
    %v70 = vmax.f32 %v68, 0.0
    %v71 = vmax.f32 %v69, 0.0
    %v72 = vadd.f32 %v70, 1e-05
    %v73 = vadd.f32 %v71, 1e-05
    %v74 = vrsqrt.pop %v72
    %v75 = vrsqrt.pop %v73
    %v76 = vsub.f32 %v50, %v62
    %v77 = vsub.f32 %v51, %v63
    %v78 = vmul.f32 %v76, %v74
    %v79 = vmul.f32 %v77, %v75
    %v80 = vld [vmem:[%s2] sm:$0x1]
    %v82 = vlaneseq
    %v83 = vshrl.u32 %v82, 7
    %v84 = vsub.s32 0, %v83
    %v85 = vrot.slane %v80, %v84
    %v87 = vmul.f32 %v78, %v85
    %v88 = vmul.f32 %v79, %v85
    %v89 = vld [vmem:[%s3] sm:$0x1]
    %v91 = vlaneseq
    %v92 = vshrl.u32 %v91, 7
    %v93 = vsub.s32 0, %v92
    %v94 = vrot.slane %v89, %v93
    %v96 = vadd.f32 %v87, %v94
    %v97 = vadd.f32 %v88, %v94
    %98 = vst [vmem:[#allocation7] sm:$0xff] %v96
    %99 = vst [vmem:[#allocation7 + $0x8] sm:$0xff] %v97
    // Predicated region
    $region26: #{tpu_custom_call.1} parent=1 // pred_check
      _
    $region27: #{tpu_custom_call.1} parent=1 // pred_check_branch
      %101 = sbr.rel (0) target = $region29
    $region28: #{tpu_custom_call.1} parent=1 // pred_region
      %s103 = ssub.s32 256, 256
      %104 = vsyncadd [#allocation4], %s103
      %s105 = sshll.u32 [#allocation7], 4
      %s106 = int_to_ptr.vmem [resolvable:$true] %s105
      %111 = dma.vmem_to_hbm [thread:$0]  %s106, 256, %s4, [#allocation4], 128, 128, 8
    $region29: #{tpu_custom_call.1} parent=1 // pred_fallthru
      _
    // Predicated region
    $region30: #{tpu_custom_call.1} parent=1 // pred_check
      _
    $region31: #{tpu_custom_call.1} parent=1 // pred_check_branch
      %113 = sbr.rel (0) target = $region33
    $region32: #{tpu_custom_call.1} parent=1 // pred_region
      %114 = dma.done [#allocation4], 256
    $region33: #{tpu_custom_call.1} parent=1 // pred_fallthru
      _
    %115 = vsyncpa [#allocation3], 1
    %116 = vsyncpa [#allocation6], 1
    %117 = vsyncpa [#allocation4], 1

</llo_original>
